<compile_context>
chip_gen: v7x
topology: tpu7x:2x2x1
jax: 0.10.0
libtpu: 0.0.40
codegen_flags: <defaults>
</compile_context>

<pallas_src>
import math

import jax
import jax.numpy as jnp
from jax.experimental import pallas as pl
from jax.experimental.pallas import tpu as pltpu


# ---------------------------------------------------------------------------
# Model dimensions (small, consistent with the module's forward pass)
# ---------------------------------------------------------------------------
B = 2          # batch
C_IN = 4       # n_channels
L = 16         # sequence length
K = 3          # conv kernel size
C_OUT = 32     # conv out channels
N_CLASSES = 2  # fc out features
L_OUT = L - K + 1  # 'VALID' conv output length


# ---------------------------------------------------------------------------
# One-time parameter fusion (NOT on the per-call path)
# ---------------------------------------------------------------------------
def fuse_params(w_conv, b_conv, w_fc, b_fc):
    """Fold conv + mean-pool + fc into (G, b_eff) for NCW-flattened inputs.

    w_conv: (C_OUT, C_IN, K)    b_conv: (C_OUT,)
    w_fc  : (N_CLASSES, C_OUT)  b_fc  : (N_CLASSES,)
    Returns G: (C_IN*L, N_CLASSES), b_eff: (N_CLASSES,).
    """
    # Contract conv weight with fc weight over conv output channels.
    w_cf = jnp.einsum('oik,no->ikn', w_conv, w_fc)               # (C_IN, K, N)
    # Window/pool matrix: M[k, t] = 1 iff input time t is read by conv tap k
    # in the VALID conv, i.e. k <= t < k + L_OUT.  Mean-pool gives the 1/L_OUT.
    t_idx = jnp.arange(L)[None, :]
    k_idx = jnp.arange(K)[:, None]
    m = ((t_idx >= k_idx) & (t_idx < k_idx + L_OUT)).astype(jnp.float32)  # (K, L)
    g = jnp.einsum('kt,ikn->itn', m, w_cf) / float(L_OUT)        # (C_IN, L, N)
    g = g.reshape(C_IN * L, N_CLASSES)   # same (ci, t) flatten order as NCW input
    b_eff = b_conv @ w_fc.T + b_fc                               # (N_CLASSES,)
    return g, b_eff


# ---------------------------------------------------------------------------
# Kernel: logits = x2d @ G + b_eff   (single MXU matmul + VPU bias add)
# ---------------------------------------------------------------------------
def net_kernel(x_ref, g_ref, b_ref, o_ref):
    """Ref shapes:
      x_ref : (B, C_IN*L)          VMEM  NCW-flattened input
      g_ref : (C_IN*L, N_CLASSES)  VMEM  fused conv+pool+fc weight
      b_ref : (N_CLASSES,)         SMEM  fused bias (scalar path, no VMEM DMA)
      o_ref : (B, N_CLASSES)       VMEM  logits
    """
    acc = jnp.dot(x_ref[...], g_ref[...], preferred_element_type=jnp.float32)
    # Rebuild the tiny bias row from SMEM scalars (N_CLASSES static selects on
    # the VPU — cheaper than a dedicated padded VMEM buffer + DMA for 8 bytes).
    n_classes = o_ref.shape[-1]
    col = jax.lax.broadcasted_iota(jnp.int32, acc.shape, 1)
    bias = jnp.zeros(acc.shape, jnp.float32)
    for c in range(n_classes):
        bias = jnp.where(col == c, b_ref[c], bias)
    o_ref[...] = acc + bias


def _net_forward(x_ncw, g, b_eff):
    """x_ncw: (B, C_IN, L) float32 (PyTorch NCW layout).  Returns (B, N_CLASSES)."""
    batch, c_in, seq = x_ncw.shape
    n_classes = g.shape[-1]
    # Contiguous flatten of NCW -> (B, C_IN*L): metadata only, no data movement.
    x2d = x_ncw.reshape(batch, c_in * seq)

    return pl.pallas_call(
        net_kernel,
        out_shape=jax.ShapeDtypeStruct((batch, n_classes), jnp.float32),
        # Grid-less call: whole-array blocks, no pipelining scaffolding.
        in_specs=[
            pl.BlockSpec(memory_space=pltpu.MemorySpace.VMEM),   # x2d
            pl.BlockSpec(memory_space=pltpu.MemorySpace.VMEM),   # G
            pl.BlockSpec(memory_space=pltpu.MemorySpace.SMEM),   # b_eff (scalars)
        ],
        out_specs=pl.BlockSpec(memory_space=pltpu.MemorySpace.VMEM),
    )(x2d, g, b_eff)


# One dispatch per forward (reshape fuses into the jitted program).
net_forward = jax.jit(_net_forward)


# ---------------------------------------------------------------------------
# Pure-JAX reference mirroring the PyTorch forward exactly
# ---------------------------------------------------------------------------
def net_reference(x_ncw, w_conv, b_conv, w_fc, b_fc):
    y = jax.lax.conv_general_dilated(
        x_ncw, w_conv, window_strides=(1,), padding="VALID",
        dimension_numbers=("NCH", "OIH", "NCH"))          # (B, C_OUT, L_OUT)
    y = y + b_conv[None, :, None]
    pooled = jnp.mean(y, axis=-1)                         # AdaptiveAvgPool1d(1).squeeze(-1)
    return pooled @ w_fc.T + b_fc


if __name__ == "__main__":
    key = jax.random.PRNGKey(0)
    kx, kw1, kb1, kw2, kb2 = jax.random.split(key, 5)

    # Deterministic input (stand-in for the librosa/JTFS features), NCW layout.
    x = jax.random.normal(kx, (B, C_IN, L), dtype=jnp.float32)

    # Deterministic parameter init (PyTorch-default-style uniform bounds).
    bound_conv = 1.0 / math.sqrt(C_IN * K)
    w_conv = jax.random.uniform(kw1, (C_OUT, C_IN, K), jnp.float32,
                                -bound_conv, bound_conv)
    b_conv = jax.random.uniform(kb1, (C_OUT,), jnp.float32,
                                -bound_conv, bound_conv)
    bound_fc = 1.0 / math.sqrt(C_OUT)
    w_fc = jax.random.uniform(kw2, (N_CLASSES, C_OUT), jnp.float32,
                              -bound_fc, bound_fc)
    b_fc = jax.random.uniform(kb2, (N_CLASSES,), jnp.float32,
                              -bound_fc, bound_fc)

    # One-time weight fusion at setup (off the per-call path).
    g, b_eff = fuse_params(w_conv, b_conv, w_fc, b_fc)
    g = jax.block_until_ready(g)
    b_eff = jax.block_until_ready(b_eff)

    out = net_forward(x, g, b_eff)
    out = jax.block_until_ready(out)

    ref = net_reference(x, w_conv, b_conv, w_fc, b_fc)
    assert out.shape == (B, N_CLASSES)
    assert jnp.allclose(out, ref, atol=1e-5, rtol=1e-5), (out, ref)

    print("KERNEL_OK")
</pallas_src>

<mosaic_0001>
module attributes {stable_mosaic.version = 11 : i64} {
  func.func @net_kernel(%arg0: memref<2x64xf32, #tpu.memory_space<vmem>>, %arg1: memref<64x2xf32, #tpu.memory_space<vmem>>, %arg2: memref<2xf32, #tpu.memory_space<smem>>, %arg3: memref<2x2xf32, #tpu.memory_space<vmem>>) attributes {dimension_semantics = [], scalar_prefetch = 0 : i64, scratch_operands = 0 : i64, tpu.core_type = #tpu.core_type<tc>} {
    %c0 = arith.constant 0 : index
    %c0_0 = arith.constant 0 : index
    %0 = vector.load %arg0[%c0, %c0_0] : memref<2x64xf32, #tpu.memory_space<vmem>>, vector<2x64xf32>
    %c0_1 = arith.constant 0 : index
    %c0_2 = arith.constant 0 : index
    %1 = vector.load %arg1[%c0_1, %c0_2] : memref<64x2xf32, #tpu.memory_space<vmem>>, vector<64x2xf32>
    %cst = arith.constant dense<0.000000e+00> : vector<2x2xf32>
    %2 = tpu.matmul %0, %1, %cst {dimension_numbers = #tpu.dot_dimension_numbers<[1], [0], [0], [1], [0, 0, 1, 1], [], []>} : vector<2x64xf32>, vector<64x2xf32>, vector<2x2xf32> -> vector<2x2xf32>
    %3 = tpu.iota {dimensions = array<i32: 1>} : vector<2x2xi32>
    %cst_3 = arith.constant 0.000000e+00 : f32
    %4 = vector.broadcast %cst_3 : f32 to vector<2x2xf32>
    %c0_i32 = arith.constant 0 : i32
    %5 = vector.broadcast %c0_i32 : i32 to vector<2x2xi32>
    %6 = arith.cmpi eq, %3, %5 : vector<2x2xi32>
    %c0_4 = arith.constant 0 : index
    %7 = memref.load %arg2[%c0_4] : memref<2xf32, #tpu.memory_space<smem>>
    %8 = vector.broadcast %7 : f32 to vector<2x2xf32>
    %9 = arith.select %6, %8, %4 : vector<2x2xi1>, vector<2x2xf32>
    %c1_i32 = arith.constant 1 : i32
    %10 = vector.broadcast %c1_i32 : i32 to vector<2x2xi32>
    %11 = arith.cmpi eq, %3, %10 : vector<2x2xi32>
    %c1 = arith.constant 1 : index
    %12 = memref.load %arg2[%c1] : memref<2xf32, #tpu.memory_space<smem>>
    %13 = vector.broadcast %12 : f32 to vector<2x2xf32>
    %14 = arith.select %11, %13, %9 : vector<2x2xi1>, vector<2x2xf32>
    %15 = arith.addf %2, %14 : vector<2x2xf32>
    %c0_5 = arith.constant 0 : index
    %c0_6 = arith.constant 0 : index
    %16 = vector.load %arg3[%c0_5, %c0_6] : memref<2x2xf32, #tpu.memory_space<vmem>>, vector<2x2xf32>
    tpu.vector_store %arg3[%c0_5, %c0_6], %15 {strides = array<i32>} : memref<2x2xf32, #tpu.memory_space<vmem>>, vector<2x2xf32>,
    return
  }
}

</mosaic_0001>

<llo_original>
// kernel: _net_forward.1
$region0: #{_net_forward.1}
  #allocation0 [shape = 'u32[]', space=smem, size = 0x4, offset = 0x4, fixed_abs, tag = 'smem constant byte address 0x4 - core index']
  #allocation1 [shape = 'u32[144,128]{1,0:T(1,128)}', space=vmem, size = 0x12000, scoped, tag = 'internal scratch']
  %s0 = inlined_call_operand.vmem [shape: f32[2,64], index: 0, kind: input, shape index: {}]
  %s1 = inlined_call_operand.vmem [shape: f32[64,2], index: 1, kind: input, shape index: {}]
  %s2 = inlined_call_operand.vmem [shape: f32[2], index: 2, kind: input, shape index: {}]
  %s3 = inlined_call_operand.hbm [shape: f32[2,2], index: 3, kind: output, shape index: {}]
  %s4 = sld [smem:[#allocation0]]
  $region26: #{_net_forward.1} parent=0
    _
  %s6 = ssub.s32 1, %s4
  %s7 = scalar_select 0, %s6, %s4
  $region1: #{_net_forward.1} parent=0
    #allocation2 [shape = 'u8[512]{0}', space=smem, size = 0x200, scoped, tag = 'input window, operand 2, single buffered']
    #allocation3 [shape = 's32[1]{0}', space=sflag, size = 0x4, scoped, tag = 'scoped memory for _net_forward.1']
    #allocation4 [shape = 's32[1]{0}', space=sflag, size = 0x4, scoped, tag = 'scoped memory for _net_forward.1']
    #allocation5 [shape = 'u8[1024]{0}', space=vmem, size = 0x400, scoped, tag = 'output window, operand 0, single buffered']
    %8 = vsyncpa [#allocation4], 0
    %9 = vsyncpa [#allocation3], 0
    // Predicated region
    $region2: #{_net_forward.1} parent=1 // pred_check
      _
    $region3: #{_net_forward.1} parent=1 // pred_check_branch
      %11 = sbr.rel (0) target = $region5
    $region4: #{_net_forward.1} parent=1 // pred_region
      _
    $region5: #{_net_forward.1} parent=1 // pred_fallthru
      _
    // Predicated region
    $region6: #{_net_forward.1} parent=1 // pred_check
      _
    $region7: #{_net_forward.1} parent=1 // pred_check_branch
      %13 = sbr.rel (0) target = $region9
    $region8: #{_net_forward.1} parent=1 // pred_region
      _
    $region9: #{_net_forward.1} parent=1 // pred_fallthru
      _
    // Predicated region
    $region10: #{_net_forward.1} parent=1 // pred_check
      _
    $region11: #{_net_forward.1} parent=1 // pred_check_branch
      %15 = sbr.rel (0) target = $region13
    $region12: #{_net_forward.1} parent=1 // pred_region
      %s17 = ssub.s32 16, 16
      %18 = vsyncadd [#allocation4], %s17
      %s20 = sshll.u32 %s2, 4
      %s21 = int_to_ptr.vmem [resolvable:$true] %s20
      %23 = dma.vmem_to_smem %s21, 16, [#allocation2], [#allocation4]
    $region13: #{_net_forward.1} parent=1 // pred_fallthru
      _
    // Predicated region
    $region14: #{_net_forward.1} parent=1 // pred_check
      _
    $region15: #{_net_forward.1} parent=1 // pred_check_branch
      %25 = sbr.rel (0) target = $region17
    $region16: #{_net_forward.1} parent=1 // pred_region
      %26 = dma.done [#allocation4], 16
    $region17: #{_net_forward.1} parent=1 // pred_fallthru
      _
    %27 = sfence
    %v28 = vld [vmem:[%s0] sm:$0x3]
    %v29 = vld [vmem:[%s1] sm:$0xff]
    %v30 = vld [vmem:[%s1 + $0x8] sm:$0xff]
    %v31 = vld [vmem:[%s1 + $0x10] sm:$0xff]
    %v32 = vld [vmem:[%s1 + $0x18] sm:$0xff]
    %v33 = vld [vmem:[%s1 + $0x20] sm:$0xff]
    %v34 = vld [vmem:[%s1 + $0x28] sm:$0xff]
    %v35 = vld [vmem:[%s1 + $0x30] sm:$0xff]
    %v36 = vld [vmem:[%s1 + $0x38] sm:$0xff]
    %v37 = vlaneseq
    %v38 = vand.u32 %v37, 127
    %vm39 = vcmp.eq.s32.totalorder %v38, 0
    %s40 = sld [smem:[#allocation2]]
    %v41 = vstv %s40
    %v42 = vsel %vm39, %v41, 0.0
    %vm43 = vcmp.eq.s32.totalorder %v38, 1
    %s44 = sld [smem:[#allocation2 + $0x1]]
    %v45 = vstv %s44
    %v46 = vsel %vm43, %v45, %v42
    %vm47 = vcmask 523264
    %v49 = vsel %vm47, %v28, 0
    %51 = vmatprep.subr.mxu0 0.0
    %52 = vmatpush1.msra.mxu0 %v29
    %53 = vmatprep.subr.mxu0 0.0
    %54 = vmatpush1.msra.mxu0 %v30
    %55 = vmatprep.subr.mxu0 0.0
    %56 = vmatpush1.msra.mxu0 %v31
    %57 = vmatprep.subr.mxu0 0.0
    %58 = vmatpush1.msra.mxu0 %v32
    %59 = vmatprep.subr.mxu0 0.0
    %60 = vmatpush1.msra.mxu0 %v33
    %61 = vmatprep.subr.mxu0 0.0
    %62 = vmatpush1.msra.mxu0 %v34
    %63 = vmatprep.subr.mxu0 0.0
    %64 = vmatpush1.msra.mxu0 %v35
    %65 = vmatprep.subr.mxu0 0.0
    %66 = vmatpush1.msra.mxu0 %v36
    %67 = vmatprep.subr.mxu0 0.0
    %68 = vmatpush1.msra.mxu0 0.0
    %69 = vmatprep.subr.mxu0 0.0
    %70 = vmatpush1.msra.mxu0 0.0
    %71 = vmatprep.subr.mxu0 0.0
    %72 = vmatpush1.msra.mxu0 0.0
    %73 = vmatprep.subr.mxu0 0.0
    %74 = vmatpush1.msra.mxu0 0.0
    %75 = vmatprep.subr.mxu0 0.0
    %76 = vmatpush1.msra.mxu0 0.0
    %77 = vmatprep.subr.mxu0 0.0
    %78 = vmatpush1.msra.mxu0 0.0
    %79 = vmatprep.subr.mxu0 0.0
    %80 = vmatpush1.msra.mxu0 0.0
    %81 = vmatprep.subr.mxu0 0.0
    %82 = vmatpush1.msra.mxu0 0.0
    %83 = vmatprep.subr.mxu0 0.0
    %84 = vmatpush1.msra.mxu0 0.0
    %85 = vmatprep.subr.mxu0 0.0
    %86 = vmatpush1.msra.mxu0 0.0
    %87 = vmatprep.subr.mxu0 0.0
    %88 = vmatpush1.msra.mxu0 0.0
    %89 = vmatprep.subr.mxu0 0.0
    %90 = vmatpush1.msra.mxu0 0.0
    %91 = vmatprep.subr.mxu0 0.0
    %92 = vmatpush1.msra.mxu0 0.0
    %93 = vmatprep.subr.mxu0 0.0
    %94 = vmatpush1.msra.mxu0 0.0
    %95 = vmatprep.subr.mxu0 0.0
    %96 = vmatpush1.msra.mxu0 0.0
    %97 = vmatprep.subr.mxu0 0.0
    %98 = vmatpush1.msra.mxu0 0.0
    %99 = vmatprep.subr.mxu0 0.0
    %100 = vmatpush1.msra.mxu0 0.0
    %101 = vmatprep.subr.mxu0 0.0
    %102 = vmatpush1.msra.mxu0 0.0
    %103 = vmatprep.subr.mxu0 0.0
    %104 = vmatpush1.msra.mxu0 0.0
    %105 = vmatprep.subr.mxu0 0.0
    %106 = vmatpush1.msra.mxu0 0.0
    %107 = vmatprep.subr.mxu0 0.0
    %108 = vmatpush1.msra.mxu0 0.0
    %109 = vmatprep.subr.mxu0 0.0
    %110 = vmatpush1.msra.mxu0 0.0
    %111 = vmatprep.subr.mxu0 0.0
    %112 = vmatpush1.msra.mxu0 0.0
    %113 = vmatprep.subr.mxu0 0.0
    %114 = vmatpush1.msra.mxu0 0.0
    %115 = vmatprep.mubr.f32.mxu0 0.0
    %116 = vmatmul.mubr.f32.gmra.mrb[0].mxu0 %v49
    %v117 = vpop.f32.mrb[0].mxu0
    %v118 = vadd.f32 %v46, %v117
    %v119 = vpop.f32.mrb[0].mxu0
    %120 = vdwg.mxu0
    %vm121 = vcmask 9216
    %122 = vst.msk [vmem:[#allocation5] sm:$0x3] %vm121, %v118
    // Predicated region
    $region18: #{_net_forward.1} parent=1 // pred_check
      _
    $region19: #{_net_forward.1} parent=1 // pred_check_branch
      %124 = sbr.rel (0) target = $region21
    $region20: #{_net_forward.1} parent=1 // pred_region
      %s126 = ssub.s32 32, 32
      %127 = vsyncadd [#allocation3], %s126
      %s129 = sshll.u32 [#allocation5], 4
      %s130 = int_to_ptr.vmem [resolvable:$true] %s129
      %132 = dma.vmem_to_hbm [thread:$0]  %s130, 32, %s3, [#allocation3]
    $region21: #{_net_forward.1} parent=1 // pred_fallthru
      _
    // Predicated region
    $region22: #{_net_forward.1} parent=1 // pred_check
      _
    $region23: #{_net_forward.1} parent=1 // pred_check_branch
      %134 = sbr.rel (0) target = $region25
    $region24: #{_net_forward.1} parent=1 // pred_region
      %135 = dma.done [#allocation3], 32
    $region25: #{_net_forward.1} parent=1 // pred_fallthru
      _
    %136 = vsyncpa [#allocation3], 1
    %137 = vsyncpa [#allocation4], 1

</llo_original>
